<compile_context>
chip_gen: v7x
topology: tpu7x:2x2x1
jax: 0.10.0
libtpu: 0.0.40
codegen_flags: <defaults>
</compile_context>

<pallas_src>
import jax
import jax.numpy as jnp
from jax.experimental import pallas as pl
from jax.experimental.pallas import tpu as pltpu

_EPS = 1e-8  # torch.cosine_similarity default eps


def _cosine_simi_kernel(x_ref, y_ref, o_ref):
    # x_ref, y_ref: (1, C, T_HW) VMEM tiles; o_ref: (1, 1, T_HW)
    x = x_ref[...].astype(jnp.float32)
    y = y_ref[...].astype(jnp.float32)

    dot = jnp.sum(x * y, axis=1, keepdims=True)            # (1, 1, T_HW)
    nx = jnp.sqrt(jnp.sum(x * x, axis=1, keepdims=True))   # (1, 1, T_HW)
    ny = jnp.sqrt(jnp.sum(y * y, axis=1, keepdims=True))   # (1, 1, T_HW)

    # torch: dot / (clamp_min(||x||, eps) * clamp_min(||y||, eps))
    denom = jnp.maximum(nx, _EPS) * jnp.maximum(ny, _EPS)
    cos = dot * pl.reciprocal(denom, approx=False)

    # map = 1 - sigmoid(cos)
    o_ref[...] = (1.0 - jax.nn.sigmoid(cos)).astype(o_ref.dtype)


def _pick_spatial_tile(C, HW, itemsize):
    """Largest lane tile (multiple of 128) keeping 2 inputs x 2 buffers <= ~12 MiB."""
    if HW % 128 != 0:
        # Last block dim must be a multiple of 128 or the full extent.
        return HW
    budget = 12 << 20  # safe under v5e 16 MiB scoped default and v7x 64 MiB physical
    max_t = budget // (4 * C * itemsize)      # 2 inputs * 2 pipeline buffers
    max_t = max(128, (max_t // 128) * 128)
    return min(HW, max_t)


def cosine_simi(x, y, *, tile_hw=None):
    """x, y: (B, C, H, W) float32/bfloat16 -> (B, 1, H, W) float32."""
    B, C, H, W = x.shape
    HW = H * W
    xf = x.reshape(B, C, HW)
    yf = y.reshape(B, C, HW)

    t_hw = tile_hw if tile_hw is not None else _pick_spatial_tile(
        C, HW, jnp.dtype(x.dtype).itemsize)
    n_hw = pl.cdiv(HW, t_hw)

    out = pl.pallas_call(
        _cosine_simi_kernel,
        out_shape=jax.ShapeDtypeStruct((B, 1, HW), jnp.float32),
        grid_spec=pltpu.PrefetchScalarGridSpec(
            num_scalar_prefetch=0,
            grid=(B, n_hw),
            in_specs=[
                pl.BlockSpec((1, C, t_hw), lambda b, s: (b, 0, s)),
                pl.BlockSpec((1, C, t_hw), lambda b, s: (b, 0, s)),
            ],
            out_specs=pl.BlockSpec((1, 1, t_hw), lambda b, s: (b, 0, s)),
        ),
        compiler_params=pltpu.CompilerParams(
            dimension_semantics=("parallel", "parallel"),
        ),
    )(xf, yf)

    return out.reshape(B, 1, H, W)


def _reference(x, y):
    x = x.astype(jnp.float32)
    y = y.astype(jnp.float32)
    dot = jnp.sum(x * y, axis=1, keepdims=True)
    nx = jnp.sqrt(jnp.sum(x * x, axis=1, keepdims=True))
    ny = jnp.sqrt(jnp.sum(y * y, axis=1, keepdims=True))
    cos = dot / (jnp.maximum(nx, _EPS) * jnp.maximum(ny, _EPS))
    return 1.0 - jax.nn.sigmoid(cos)


if __name__ == "__main__":
    key = jax.random.PRNGKey(0)
    kx, ky = jax.random.split(key)
    B, C, H, W = 2, 4, 16, 16
    x = jax.random.normal(kx, (B, C, H, W), dtype=jnp.float32)
    y = jax.random.normal(ky, (B, C, H, W), dtype=jnp.float32)

    ref = _reference(x, y)

    # Default (auto) spatial tile — single tile at this small shape.
    out = cosine_simi(x, y)
    jax.block_until_ready(out)
    assert out.shape == (B, 1, H, W)
    assert jnp.allclose(out, ref, rtol=1e-5, atol=1e-5)

    # Forced smaller tile to exercise the multi-tile spatial grid path.
    out_tiled = cosine_simi(x, y, tile_hw=128)
    jax.block_until_ready(out_tiled)
    assert jnp.allclose(out_tiled, ref, rtol=1e-5, atol=1e-5)

    print("KERNEL_OK")
</pallas_src>

<mosaic_0001>
module attributes {stable_mosaic.version = 11 : i64} {
  func.func @_cosine_simi_kernel(%arg0: i32, %arg1: i32, %arg2: memref<1x4x256xf32, #tpu.memory_space<vmem>>, %arg3: memref<1x4x256xf32, #tpu.memory_space<vmem>>, %arg4: memref<1x1x256xf32, #tpu.memory_space<vmem>>) attributes {dimension_semantics = [#tpu.dimension_semantics<parallel>, #tpu.dimension_semantics<parallel>], iteration_bounds = array<i64: 2, 1>, scalar_prefetch = 0 : i64, scratch_operands = 0 : i64, tpu.core_type = #tpu.core_type<tc>, window_params = [{transform_indices = @transform_0, window_bounds = array<i64: 1, 4, 256>}, {transform_indices = @transform_1, window_bounds = array<i64: 1, 4, 256>}, {transform_indices = @transform_2, window_bounds = array<i64: 1, 1, 256>}]} {
    %c0 = arith.constant 0 : index
    %c0_0 = arith.constant 0 : index
    %c0_1 = arith.constant 0 : index
    %0 = vector.load %arg2[%c0, %c0_0, %c0_1] : memref<1x4x256xf32, #tpu.memory_space<vmem>>, vector<1x4x256xf32>
    %c0_2 = arith.constant 0 : index
    %c0_3 = arith.constant 0 : index
    %c0_4 = arith.constant 0 : index
    %1 = vector.load %arg3[%c0_2, %c0_3, %c0_4] : memref<1x4x256xf32, #tpu.memory_space<vmem>>, vector<1x4x256xf32>
    %2 = arith.mulf %0, %1 : vector<1x4x256xf32>
    %cst = arith.constant dense<0.000000e+00> : vector<1x256xf32>
    %3 = vector.multi_reduction <add>, %2, %cst [1] : vector<1x4x256xf32> to vector<1x256xf32>
    %4 = vector.shape_cast %3 : vector<1x256xf32> to vector<1x1x256xf32>
    %5 = arith.mulf %0, %0 : vector<1x4x256xf32>
    %cst_5 = arith.constant dense<0.000000e+00> : vector<1x256xf32>
    %6 = vector.multi_reduction <add>, %5, %cst_5 [1] : vector<1x4x256xf32> to vector<1x256xf32>
    %7 = vector.shape_cast %6 : vector<1x256xf32> to vector<1x1x256xf32>
    %8 = math.sqrt %7 : vector<1x1x256xf32>
    %9 = arith.mulf %1, %1 : vector<1x4x256xf32>
    %cst_6 = arith.constant dense<0.000000e+00> : vector<1x256xf32>
    %10 = vector.multi_reduction <add>, %9, %cst_6 [1] : vector<1x4x256xf32> to vector<1x256xf32>
    %11 = vector.shape_cast %10 : vector<1x256xf32> to vector<1x1x256xf32>
    %12 = math.sqrt %11 : vector<1x1x256xf32>
    %cst_7 = arith.constant 9.99999993E-9 : f32
    %13 = vector.broadcast %cst_7 : f32 to vector<1x1x256xf32>
    %14 = arith.maximumf %8, %13 : vector<1x1x256xf32>
    %cst_8 = arith.constant 9.99999993E-9 : f32
    %15 = vector.broadcast %cst_8 : f32 to vector<1x1x256xf32>
    %16 = arith.maximumf %12, %15 : vector<1x1x256xf32>
    %17 = arith.mulf %14, %16 : vector<1x1x256xf32>
    %18 = tpu.reciprocal %17 : vector<1x1x256xf32> -> vector<1x1x256xf32>
    %19 = arith.mulf %4, %18 : vector<1x1x256xf32>
    %20 = arith.negf %19 : vector<1x1x256xf32>
    %21 = math.exp %20 : vector<1x1x256xf32>
    %cst_9 = arith.constant 1.000000e+00 : f32
    %22 = vector.broadcast %cst_9 : f32 to vector<1x1x256xf32>
    %23 = arith.addf %22, %21 : vector<1x1x256xf32>
    %24 = arith.divf %22, %23 : vector<1x1x256xf32>
    %cst_10 = arith.constant 1.000000e+00 : f32
    %25 = vector.broadcast %cst_10 : f32 to vector<1x1x256xf32>
    %26 = arith.subf %25, %24 : vector<1x1x256xf32>
    %c0_11 = arith.constant 0 : index
    %c0_12 = arith.constant 0 : index
    %c0_13 = arith.constant 0 : index
    %27 = vector.load %arg4[%c0_11, %c0_12, %c0_13] : memref<1x1x256xf32, #tpu.memory_space<vmem>>, vector<1x1x256xf32>
    tpu.vector_store %arg4[%c0_11, %c0_12, %c0_13], %26 {strides = array<i32>} : memref<1x1x256xf32, #tpu.memory_space<vmem>>, vector<1x1x256xf32>,
    return
  }
  func.func @transform_0(%arg0: i32, %arg1: i32) -> (i32, i32, i32) {
    %c0_i32 = arith.constant 0 : i32
    %c0_i32_0 = arith.constant 0 : i32
    return %arg0, %c0_i32, %arg1 : i32, i32, i32
  }
  func.func @transform_1(%arg0: i32, %arg1: i32) -> (i32, i32, i32) {
    %c0_i32 = arith.constant 0 : i32
    %c0_i32_0 = arith.constant 0 : i32
    return %arg0, %c0_i32, %arg1 : i32, i32, i32
  }
  func.func @transform_2(%arg0: i32, %arg1: i32) -> (i32, i32, i32) {
    %c0_i32 = arith.constant 0 : i32
    %c0_i32_0 = arith.constant 0 : i32
    return %arg0, %c0_i32, %arg1 : i32, i32, i32
  }
}

</mosaic_0001>

<llo_original>
// kernel: tpu_custom_call.1
$region0: #{tpu_custom_call.1}
  #allocation0 [shape = 'u32[]', space=smem, size = 0x4, offset = 0x4, fixed_abs, tag = 'smem constant byte address 0x4 - core index']
  #allocation1 [shape = 'u32[144,128]{1,0:T(1,128)}', space=vmem, size = 0x12000, scoped, tag = 'internal scratch']
  %s0 = inlined_call_operand.hbm [shape: f32[2,4,256], index: 0, kind: input, shape index: {}]
  %s1 = inlined_call_operand.hbm [shape: f32[2,4,256], index: 1, kind: input, shape index: {}]
  %s2 = inlined_call_operand.hbm [shape: f32[2,1,256], index: 2, kind: output, shape index: {}]
  %s3 = sld [smem:[#allocation0]]
  $region49: #{tpu_custom_call.1} parent=0
    _
  %s5 = ssub.s32 1, %s3
  %s6 = scalar_select 0, %s5, %s3
  $region1: #{tpu_custom_call.1} parent=0
    #allocation2 [shape = 'u8[8192]{0}', space=vmem, size = 0x2000, scoped, tag = 'input window, operand 0']
    #allocation3 [shape = 's32[2]{0}', space=sflag, size = 0x8, scoped, tag = 'scoped memory for tpu_custom_call.1']
    #allocation4 [shape = 's32[2]{0}', space=sflag, size = 0x8, scoped, tag = 'scoped memory for tpu_custom_call.1']
    #allocation5 [shape = 'u8[8192]{0}', space=vmem, size = 0x2000, scoped, tag = 'input window, operand 1']
    #allocation6 [shape = 's32[2]{0}', space=sflag, size = 0x8, scoped, tag = 'scoped memory for tpu_custom_call.1']
    #allocation7 [shape = 'u8[2048]{0}', space=vmem, size = 0x800, scoped, tag = 'output window, operand 0']
    %7 = vsyncpa [#allocation3], 0
    %s8 = scalar_lea.sflag [#allocation3], 1
    %9 = vsyncpa %s8, 0
    %10 = vsyncpa [#allocation6], 0
    %s11 = scalar_lea.sflag [#allocation6], 1
    %12 = vsyncpa %s11, 0
    %13 = vsyncpa [#allocation4], 0
    %s14 = scalar_lea.sflag [#allocation4], 1
    %15 = vsyncpa %s14, 0
    loop: start=0, step=1, limit=4
    $region2: #{tpu_custom_call.1} parent=1 // loop_pre_header
      _
    $region3: #{tpu_custom_call.1} parent=1 // loop_header
      %s17 = sphi 0, %s21
      %p18 = scmp.ge.s32.totalorder %s17, 4
      %s24 = sphi 0, %s36
      %s25 = sphi 0, %s32
      %s26 = sphi 0, %s24
      %s27 = sphi 0, %s25
      %s28 = sphi 0, %s26
      %s29 = sphi 0, %s27
      %s41 = sphi 0, %s43
      %s44 = sphi 0, %s41
      %s45 = sphi 0, %s44
      %s61 = sphi 0, %s45
      %s69 = sphi 0, %s71
      %s72 = sphi 0, %s69
      %s73 = sphi 0, %s72
      %s89 = sphi 0, %s73
      %s97 = sphi 0, %s99
      %s100 = sphi 0, %s97
      %s101 = sphi 0, %s100
      %s117 = sphi 0, %s101
    $region4: #{tpu_custom_call.1} parent=1 // loop_header_branch
      %20 = sbr.rel (%p18) target = $region8
    $region5: #{tpu_custom_call.1} parent=1 // loop_body
      %s22 = ssub.s32 %s17, 1
      %s23 = ssub.s32 %s17, 2
      %s30 = sadd.s32 1, %s25
      %p31 = scmp.ge.s32.totalorder %s30, 1
      %s32 = scalar_select %p31, 0, %s30
      %s33 = sadd.s32 1, %s24
      %s34 = scalar_select %p31, %s33, %s24
      %p35 = scmp.ge.s32.totalorder %s34, 2
      %s36 = scalar_select %p35, 0, %s34
      %s37 = ssub.s32 %s24, %s36
      %s38 = ssub.s32 %s25, %s32
      %s39 = sor.u32 %s37, %s38
      %p40 = scmp.eq.s32.totalorder %s39, 0
      %s42 = sadd.s32 %s41, 1
      %s43 = scalar_select %p40, %s41, %s42
      %p46 = pneg %p40
      %p47 = scmp.eq.s32.totalorder %s17, 1
      %p48 = por %p46, %p47
      %p49 = scmp.ne.s32.totalorder %s41, %s44
      %p50 = scmp.eq.s32.totalorder %s17, 0
      %p51 = por %p49, %p50
      %p52 = scmp.ne.s32.totalorder %s41, %s44
      %p53 = scmp.eq.s32.totalorder %s22, 1
      %p54 = por %p52, %p53
      %p55 = scmp.ne.s32.totalorder %s44, %s45
      %p56 = scmp.eq.s32.totalorder %s22, 0
      %p57 = por %p55, %p56
      %p58 = scmp.ne.s32.totalorder %s44, %s45
      %p59 = scmp.eq.s32.totalorder %s23, 1
      %p60 = por %p58, %p59
      %p62 = scmp.ne.s32.totalorder %s45, %s61
      %p63 = scmp.eq.s32.totalorder %s23, 0
      %p64 = por %p62, %p63
      %s65 = ssub.s32 %s24, %s36
      %s66 = ssub.s32 %s25, %s32
      %s67 = sor.u32 %s65, %s66
      %p68 = scmp.eq.s32.totalorder %s67, 0
      %s70 = sadd.s32 %s69, 1
      %s71 = scalar_select %p68, %s69, %s70
      %p74 = pneg %p68
      %p75 = scmp.eq.s32.totalorder %s17, 1
      %p76 = por %p74, %p75
      %p77 = scmp.ne.s32.totalorder %s69, %s72
      %p78 = scmp.eq.s32.totalorder %s17, 0
      %p79 = por %p77, %p78
      %p80 = scmp.ne.s32.totalorder %s69, %s72
      %p81 = scmp.eq.s32.totalorder %s22, 1
      %p82 = por %p80, %p81
      %p83 = scmp.ne.s32.totalorder %s72, %s73
      %p84 = scmp.eq.s32.totalorder %s22, 0
      %p85 = por %p83, %p84
      %p86 = scmp.ne.s32.totalorder %s72, %s73
      %p87 = scmp.eq.s32.totalorder %s23, 1
      %p88 = por %p86, %p87
      %p90 = scmp.ne.s32.totalorder %s73, %s89
      %p91 = scmp.eq.s32.totalorder %s23, 0
      %p92 = por %p90, %p91
      %s93 = ssub.s32 %s24, %s36
      %s94 = ssub.s32 %s25, %s32
      %s95 = sor.u32 %s93, %s94
      %p96 = scmp.eq.s32.totalorder %s95, 0
      %s98 = sadd.s32 %s97, 1
      %s99 = scalar_select %p96, %s97, %s98
      %p102 = pneg %p96
      %p103 = scmp.eq.s32.totalorder %s17, 1
      %p104 = por %p102, %p103
      %p105 = scmp.ne.s32.totalorder %s97, %s100
      %p106 = scmp.eq.s32.totalorder %s17, 0
      %p107 = por %p105, %p106
      %p108 = scmp.ne.s32.totalorder %s97, %s100
      %p109 = scmp.eq.s32.totalorder %s22, 1
      %p110 = por %p108, %p109
      %p111 = scmp.ne.s32.totalorder %s100, %s101
      %p112 = scmp.eq.s32.totalorder %s22, 0
      %p113 = por %p111, %p112
      %p114 = scmp.ne.s32.totalorder %s100, %s101
      %p115 = scmp.eq.s32.totalorder %s23, 1
      %p116 = por %p114, %p115
      %p118 = scmp.ne.s32.totalorder %s101, %s117
      %p119 = scmp.eq.s32.totalorder %s23, 0
      %p120 = por %p118, %p119
      %p121 = scmp.le.s32.totalorder 1, %s17
      %p122 = scmp.lt.s32.totalorder %s17, 3
      %p123 = pnand %p121, %p122
      %p124 = pneg %p123
      // Predicated region
      $region9: #{tpu_custom_call.1} parent=5 // pred_check
        _
      $region10: #{tpu_custom_call.1} parent=5 // pred_check_branch
        %126 = sbr.rel (%p123) target = $region12
      $region11: #{tpu_custom_call.1} parent=5 // pred_region
        %s127 = ssub.s32 %s17, 1
      $region12: #{tpu_custom_call.1} parent=5 // pred_fallthru
        _
      %p128 = scmp.lt.s32.totalorder %s17, 2
      // Predicated region
      $region13: #{tpu_custom_call.1} parent=5 // pred_check
        %p129 = pneg %p128
      $region14: #{tpu_custom_call.1} parent=5 // pred_check_branch
        %131 = sbr.rel (%p129) target = $region16
      $region15: #{tpu_custom_call.1} parent=5 // pred_region
        // Predicated region
        $region17: #{tpu_custom_call.1} parent=15 // pred_check
          %p132 = pneg %p51
        $region18: #{tpu_custom_call.1} parent=15 // pred_check_branch
          %134 = sbr.rel (%p132) target = $region20
        $region19: #{tpu_custom_call.1} parent=15 // pred_region
          %s135 = sand.u32 %s41, 1
          %s136 = scalar_lea.sflag [#allocation3], %s135
          %s137 = sand.u32 %s41, 1
          %s138 = smul.addr %s137, 8
          %s139 = scalar_lea.vmem [#allocation2], %s138
          %s140 = smul.u32 2, %s25
          %s142 = ssub.s32 128, 128
          %143 = vsyncadd %s136, %s142
          %s144 = smul.addr %s24, 2
          %s145 = sadd.s32 %s140, %s144
          %s146 = smul.addr %s145, 64
          %s147 = scalar_lea.hbm %s0, %s146
          %s149 = sshll.u32 %s139, 4
          %s150 = int_to_ptr.vmem [resolvable:$true] %s149
          %152 = dma.hbm_to_vmem [thread:$0]  %s147, 128, %s150, %s136
        $region20: #{tpu_custom_call.1} parent=15 // pred_fallthru
          _
        // Predicated region
        $region21: #{tpu_custom_call.1} parent=15 // pred_check
          %p153 = pneg %p79
        $region22: #{tpu_custom_call.1} parent=15 // pred_check_branch
          %155 = sbr.rel (%p153) target = $region24
        $region23: #{tpu_custom_call.1} parent=15 // pred_region
          %s156 = sand.u32 %s69, 1
          %s157 = scalar_lea.sflag [#allocation6], %s156
          %s158 = sand.u32 %s69, 1
          %s159 = smul.addr %s158, 8
          %s160 = scalar_lea.vmem [#allocation5], %s159
          %s161 = smul.u32 2, %s25
          %s163 = ssub.s32 128, 128
          %164 = vsyncadd %s157, %s163
          %s165 = smul.addr %s24, 2
          %s166 = sadd.s32 %s161, %s165
          %s167 = smul.addr %s166, 64
          %s168 = scalar_lea.hbm %s1, %s167
          %s170 = sshll.u32 %s160, 4
          %s171 = int_to_ptr.vmem [resolvable:$true] %s170
          %173 = dma.hbm_to_vmem [thread:$0]  %s168, 128, %s171, %s157
        $region24: #{tpu_custom_call.1} parent=15 // pred_fallthru
          _
      $region16: #{tpu_custom_call.1} parent=5 // pred_fallthru
        _
      %p174 = scmp.le.s32.totalorder 1, %s17
      %p175 = scmp.lt.s32.totalorder %s17, 3
      %p176 = pnand %p174, %p175
      %p177 = pneg %p176
      // Predicated region
      $region25: #{tpu_custom_call.1} parent=5 // pred_check
        _
      $region26: #{tpu_custom_call.1} parent=5 // pred_check_branch
        %179 = sbr.rel (%p176) target = $region28
      $region27: #{tpu_custom_call.1} parent=5 // pred_region
        %s180 = ssub.s32 %s17, 1
        %s181 = sand.u32 %s44, 1
        %s182 = scalar_lea.sflag [#allocation3], %s181
        %s183 = sand.u32 %s44, 1
        %s184 = smul.addr %s183, 8
        %s185 = scalar_lea.vmem [#allocation2], %s184
        // Predicated region
        $region29: #{tpu_custom_call.1} parent=27 // pred_check
          %p186 = pneg %p57
        $region30: #{tpu_custom_call.1} parent=27 // pred_check_branch
          %188 = sbr.rel (%p186) target = $region32
        $region31: #{tpu_custom_call.1} parent=27 // pred_region
          %189 = dma.done %s182, 128
        $region32: #{tpu_custom_call.1} parent=27 // pred_fallthru
          _
        %s190 = sand.u32 %s72, 1
        %s191 = scalar_lea.sflag [#allocation6], %s190
        %s192 = sand.u32 %s72, 1
        %s193 = smul.addr %s192, 8
        %s194 = scalar_lea.vmem [#allocation5], %s193
        // Predicated region
        $region33: #{tpu_custom_call.1} parent=27 // pred_check
          %p195 = pneg %p85
        $region34: #{tpu_custom_call.1} parent=27 // pred_check_branch
          %197 = sbr.rel (%p195) target = $region36
        $region35: #{tpu_custom_call.1} parent=27 // pred_region
          %198 = dma.done %s191, 128
        $region36: #{tpu_custom_call.1} parent=27 // pred_fallthru
          _
        %s199 = sand.u32 %s44, 1
        %s200 = scalar_lea.sflag [#allocation3], %s199
        %s201 = sand.u32 %s44, 1
        %s202 = smul.addr %s201, 8
        %s203 = scalar_lea.vmem [#allocation2], %s202
        %p204 = pneg %p57
        %p205 = pneg %p54
        %s206 = sand.u32 %s72, 1
        %s207 = scalar_lea.sflag [#allocation6], %s206
        %s208 = sand.u32 %s72, 1
        %s209 = smul.addr %s208, 8
        %s210 = scalar_lea.vmem [#allocation5], %s209
        %p211 = pneg %p85
        %p212 = pneg %p82
        %p213 = pneg %p113
        %p214 = pneg %p110
        %s215 = sand.u32 %s100, 1
        %s216 = scalar_lea.sflag [#allocation4], %s215
        %s217 = sand.u32 %s100, 1
        %s218 = smul.addr %s217, 2
        %s219 = scalar_lea.vmem [#allocation7], %s218
        %s220 = smul.u32 2, %s27
        %s221 = smul.u32 2, %s27
        %s222 = smul.u32 2, %s27
        %v223 = vld [vmem:[%s185] sm:$0xff]
        %v224 = vld [vmem:[%s194] sm:$0xff]
        %v225 = vmul.f32 %v223, %v224
        %v227 = vcombine.high %v225, %v225
        %vm229 = vcmask 1043456
        %v230 = vsel %vm229, %v225, 0.0
        %v231 = vrot.slane %v230, 4
        %v232 = vadd.f32 %v230, %v231
        %v233 = vrot.slane %v232, 2
        %v234 = vadd.f32 %v232, %v233
        %v235 = vrot.slane %v234, 1
        %v236 = vadd.f32 %v234, %v235
        %v237 = vsel %vm229, %v227, 0.0
        %v238 = vrot.slane %v237, 4
        %v239 = vadd.f32 %v237, %v238
        %v240 = vrot.slane %v239, 2
        %v241 = vadd.f32 %v239, %v240
        %v242 = vrot.slane %v241, 1
        %v243 = vadd.f32 %v241, %v242
        %v244 = vmul.f32 %v223, %v223
        %v246 = vcombine.high %v244, %v244
        %v248 = vsel %vm229, %v244, 0.0
        %v249 = vrot.slane %v248, 4
        %v250 = vadd.f32 %v248, %v249
        %v251 = vrot.slane %v250, 2
        %v252 = vadd.f32 %v250, %v251
        %v253 = vrot.slane %v252, 1
        %v254 = vadd.f32 %v252, %v253
        %v255 = vsel %vm229, %v246, 0.0
        %v256 = vrot.slane %v255, 4
        %v257 = vadd.f32 %v255, %v256
        %v258 = vrot.slane %v257, 2
        %v259 = vadd.f32 %v257, %v258
        %v260 = vrot.slane %v259, 1
        %v261 = vadd.f32 %v259, %v260
        %v262 = vrsqrt.pop %v254
        %v263 = vmul.f32 %v254, %v262
        %vm264 = vcmp.eq.f32.partialorder %v254, inf
        %v265 = vsel %vm264, %v254, %v263
        %vm266 = vcmp.eq.f32.partialorder %v254, 0.0
        %v267 = vand.u32 %v254, 2147483648
        %v268 = vsel %vm266, %v267, %v265
        %v269 = vrsqrt.pop %v261
        %v270 = vmul.f32 %v261, %v269
        %vm271 = vcmp.eq.f32.partialorder %v261, inf
        %v272 = vsel %vm271, %v261, %v270
        %vm273 = vcmp.eq.f32.partialorder %v261, 0.0
        %v274 = vand.u32 %v261, 2147483648
        %v275 = vsel %vm273, %v274, %v272
        %v276 = vmul.f32 %v224, %v224
        %v278 = vcombine.high %v276, %v276
        %v280 = vsel %vm229, %v276, 0.0
        %v281 = vrot.slane %v280, 4
        %v282 = vadd.f32 %v280, %v281
        %v283 = vrot.slane %v282, 2
        %v284 = vadd.f32 %v282, %v283
        %v285 = vrot.slane %v284, 1
        %v286 = vadd.f32 %v284, %v285
        %v287 = vsel %vm229, %v278, 0.0
        %v288 = vrot.slane %v287, 4
        %v289 = vadd.f32 %v287, %v288
        %v290 = vrot.slane %v289, 2
        %v291 = vadd.f32 %v289, %v290
        %v292 = vrot.slane %v291, 1
        %v293 = vadd.f32 %v291, %v292
        %v294 = vrsqrt.pop %v286
        %v295 = vmul.f32 %v286, %v294
        %vm296 = vcmp.eq.f32.partialorder %v286, inf
        %v297 = vsel %vm296, %v286, %v295
        %vm298 = vcmp.eq.f32.partialorder %v286, 0.0
        %v299 = vand.u32 %v286, 2147483648
        %v300 = vsel %vm298, %v299, %v297
        %v301 = vrsqrt.pop %v293
        %v302 = vmul.f32 %v293, %v301
        %vm303 = vcmp.eq.f32.partialorder %v293, inf
        %v304 = vsel %vm303, %v293, %v302
        %vm305 = vcmp.eq.f32.partialorder %v293, 0.0
        %v306 = vand.u32 %v293, 2147483648
        %v307 = vsel %vm305, %v306, %v304
        %v308 = vmax.f32 %v268, 1e-08
        %v309 = vmax.f32 %v275, 1e-08
        %v310 = vmax.f32 %v300, 1e-08
        %v311 = vmax.f32 %v307, 1e-08
        %v312 = vmul.f32 %v308, %v310
        %v313 = vmul.f32 %v309, %v311
        %v314 = vrcp.pop %v312
        %v315 = vrcp.pop %v313
        %v316 = vmul.f32 %v236, %v314
        %v317 = vmul.f32 %v243, %v315
        %v318 = vxor.u32 %v316, 2147483648
        %v319 = vxor.u32 %v317, 2147483648
        %v320 = vmul.f32 %v318, 1.442695
        %v321 = vpow.pop %v320
        %v322 = vmul.f32 %v319, 1.442695
        %v323 = vpow.pop %v322
        %v324 = vadd.f32 %v321, 1.0
        %v325 = vadd.f32 %v323, 1.0
        %v326 = vrcp.pop %v324
        %v327 = vmul.f32 1.0, %v326
        %v328 = vrcp.pop %v325
        %v329 = vmul.f32 1.0, %v328
        %v330 = vsub.f32 1.0, %v327
        %v331 = vsub.f32 1.0, %v329
        %v334 = vcombine.low %v330, %v331
        %v336 = vunpack.c.l.s4 1966171168
        %v337 = vunpack.c.0.s8 %v336
        %v338 = vlaneseq
        %v339 = vshrl.u32 %v338, 7
        %v340 = vsub.s32 %v337, %v339
        %v341 = vrot.slane %v334, %v340
        %v343 = vunpack.c.l.s4 1966171168
        %v344 = vunpack.c.0.s8 %v343
        %v345 = vlaneseq
        %v346 = vshrl.u32 %v345, 7
        %v347 = vsub.s32 %v344, %v346
        %v348 = vrot.slane %v341, %v347
        %v350 = vlaneseq
        %vm351 = vcmp.ge.s32.totalorder %v350, 0
        %vm352 = vcmp.lt.s32.totalorder %v350, 256
        %vm353 = vmand %vm351, %vm352
        %354 = vst.msk [vmem:[%s219] sm:$0x3] %vm353, %v348
        %s355 = sand.u32 %s100, 1
        %s356 = scalar_lea.sflag [#allocation4], %s355
        %s357 = sand.u32 %s100, 1
        %s358 = smul.addr %s357, 2
        %s359 = scalar_lea.vmem [#allocation7], %s358
        // Predicated region
        $region37: #{tpu_custom_call.1} parent=27 // pred_check
          %p360 = pneg %p110
        $region38: #{tpu_custom_call.1} parent=27 // pred_check_branch
          %362 = sbr.rel (%p360) target = $region40
        $region39: #{tpu_custom_call.1} parent=27 // pred_region
          %s363 = smul.u32 2, %s27
          %s365 = ssub.s32 32, 32
          %366 = vsyncadd %s356, %s365
          %s367 = smul.addr %s26, 2
          %s368 = sadd.s32 %s363, %s367
          %s369 = smul.addr %s368, 16
          %s370 = scalar_lea.hbm %s2, %s369
          %s372 = sshll.u32 %s359, 4
          %s373 = int_to_ptr.vmem [resolvable:$true] %s372
          %375 = dma.vmem_to_hbm [thread:$0]  %s373, 32, %s370, %s356
        $region40: #{tpu_custom_call.1} parent=27 // pred_fallthru
          _
      $region28: #{tpu_custom_call.1} parent=5 // pred_fallthru
        _
      %p376 = scmp.le.s32.totalorder 2, %s17
      // Predicated region
      $region41: #{tpu_custom_call.1} parent=5 // pred_check
        %p377 = pneg %p376
      $region42: #{tpu_custom_call.1} parent=5 // pred_check_branch
        %379 = sbr.rel (%p377) target = $region44
      $region43: #{tpu_custom_call.1} parent=5 // pred_region
        %s380 = ssub.s32 %s17, 2
        // Predicated region
        $region45: #{tpu_custom_call.1} parent=43 // pred_check
          %p381 = pneg %p116
        $region46: #{tpu_custom_call.1} parent=43 // pred_check_branch
          %383 = sbr.rel (%p381) target = $region48
        $region47: #{tpu_custom_call.1} parent=43 // pred_region
          %s384 = sand.u32 %s101, 1
          %s385 = scalar_lea.sflag [#allocation4], %s384
          %s386 = sand.u32 %s101, 1
          %s387 = smul.addr %s386, 2
          %s388 = scalar_lea.vmem [#allocation7], %s387
          %389 = dma.done %s385, 32
        $region48: #{tpu_custom_call.1} parent=43 // pred_fallthru
          _
      $region44: #{tpu_custom_call.1} parent=5 // pred_fallthru
        _
    $region6: #{tpu_custom_call.1} parent=1 // loop_footer
      %s21 = sadd.s32 1, %s17
    $region7: #{tpu_custom_call.1} parent=1 // loop_footer_branch
      %16 = sbr.rel target = $region3
    $region8: #{tpu_custom_call.1} parent=1 // loop_exit
      _
    %390 = vsyncpa [#allocation3], 1
    %s391 = scalar_lea.sflag [#allocation3], 1
    %392 = vsyncpa %s391, 1
    %393 = vsyncpa [#allocation6], 1
    %s394 = scalar_lea.sflag [#allocation6], 1
    %395 = vsyncpa %s394, 1
    %396 = vsyncpa [#allocation4], 1
    %s397 = scalar_lea.sflag [#allocation4], 1
    %398 = vsyncpa %s397, 1

</llo_original>
